<compile_context>
chip_gen: v5e
topology: v5e:2x2
jax: 0.10.0
libtpu: 0.0.40
codegen_flags: <defaults>
</compile_context>

<pallas_src>
import functools

import jax
import jax.numpy as jnp
from jax import lax
from jax.experimental import pallas as pl
from jax.experimental.pallas import tpu as pltpu

_LANES = 128
_SUBLANES = 8
_SUB_ROWS = 1024                               # compute sub-slab (512 KiB f32)
_TARGET_INPUT_BUF_BYTES = 16 * 1024 * 1024     # 2 inputs x 2 pipeline buffers
_VMEM_LIMIT_BYTES = 32 * 1024 * 1024           # <= physical on v5e/v6e/v7x


def _round_up(a, b):
    return -(-a // b) * b


def _num_tensorcores_per_chip():
    """Best-effort detection of multi-TensorCore chips (v7x); falls back to 1."""
    try:
        info = pltpu.get_tpu_info()
        for name in ("num_cores", "num_tensorcores", "tensorcore_count",
                     "core_count", "cores_per_chip"):
            v = getattr(info, name, None)
            if isinstance(v, int) and v >= 1:
                return v
    except Exception:
        pass
    try:
        if "v7" in jax.devices()[0].device_kind.lower():
            return 2
    except Exception:
        pass
    return 1


def _bce_kernel(x_ref, t_ref, o_ref, *, block_rows, sub_rows, num_chunks,
                steps_total, valid_rows, emit_mask):
    c = pl.program_id(0)          # chunk  ("parallel"; megacore split on v7x)
    i = pl.program_id(1)          # step   ("arbitrary"; reduction axis)

    @pl.when(i == 0)
    def _():
        o_ref[...] = jnp.zeros_like(o_ref)

    # Interleaved step->block mapping (block = i*num_chunks + c) keeps chunks
    # load-balanced.  The UNCLAMPED row base drives the validity mask, so a
    # duplicated trailing step (clamped in the index_map) contributes exactly
    # zero and a partial last block is masked correctly.
    row_base = (i * num_chunks + c) * block_rows
    inner_steps = block_rows // sub_rows

    def block_sum(masked):
        def body(s, acc):
            off = pl.multiple_of(s * sub_rows, sub_rows)
            x = x_ref[pl.ds(off, sub_rows), :].astype(jnp.float32)
            t = t_ref[pl.ds(off, sub_rows), :].astype(jnp.float32)
            # PyTorch binary_cross_entropy clamps the log terms at -100.
            log_x = jnp.maximum(jnp.log(x), -100.0)
            log_1mx = jnp.maximum(jnp.log(1.0 - x), -100.0)
            loss = -(t * log_x + (1.0 - t) * log_1mx)
            if masked:
                # jnp.where is a true select: NaNs from garbage rows past the
                # array end are discarded (do NOT replace with multiply).
                ridx = lax.broadcasted_iota(jnp.int32, (sub_rows, _LANES), 0)
                loss = jnp.where(ridx + (row_base + off) < valid_rows, loss, 0.0)
            # Fold the sub-slab to a single (8, 128) vreg with pure VPU adds.
            part = loss.reshape(sub_rows // _SUBLANES, _SUBLANES, _LANES).sum(axis=0)
            return acc + part

        return lax.fori_loop(0, inner_steps, body,
                             jnp.zeros((_SUBLANES, _LANES), jnp.float32),
                             unroll=True)

    if emit_mask:
        # Only boundary / duplicated blocks pay the iota + compare + select.
        is_interior = (row_base + block_rows) <= valid_rows
        acc = lax.cond(is_interior,
                       lambda: block_sum(False),
                       lambda: block_sum(True))
    else:
        acc = block_sum(False)

    o_ref[...] += acc[None]


def bce_loss(inputs, targets):
    """Mean binary cross entropy, matching F.binary_cross_entropy(reduction='mean')."""
    x = jnp.reshape(inputs, (-1,))
    t = jnp.reshape(targets, (-1,))
    n = x.shape[0]

    # Pad only up to the next lane multiple (<= 127 elements).  The (1.0, 1.0)
    # pad pair contributes exactly zero loss under the -100 clamp; row-level
    # padding is handled by in-kernel masking instead of an HBM copy.
    lane_pad = (-n) % _LANES
    if lane_pad:
        x = jnp.pad(x, (0, lane_pad), constant_values=1.0)
        t = jnp.pad(t, (0, lane_pad), constant_values=1.0)

    rows = (n + lane_pad) // _LANES
    x2d = x.reshape(rows, _LANES)
    t2d = t.reshape(rows, _LANES)

    # Block sizing: as large as possible while keeping 2 inputs x 2 pipeline
    # buffers within ~16 MiB of VMEM on every generation (v5e scoped default
    # is the tightest once raised to 32 MiB).  bf16 inputs automatically get
    # twice the rows per block.  block_rows stays a multiple of 16 so bf16
    # keeps its native (16, 128) tile.
    bytes_per_row = _LANES * (x2d.dtype.itemsize + t2d.dtype.itemsize)
    max_block_rows = max(
        _SUB_ROWS,
        (_TARGET_INPUT_BUF_BYTES // (2 * bytes_per_row)) // _SUB_ROWS * _SUB_ROWS)

    rows16 = _round_up(rows, 16)
    if rows16 <= _SUB_ROWS:
        block_rows = rows16
        sub_rows = block_rows
    else:
        block_rows = min(max_block_rows, _round_up(rows16, _SUB_ROWS))
        sub_rows = _SUB_ROWS

    steps_total = -(-rows // block_rows)

    # Split the reduction into 2 interleaved chunks only on multi-TensorCore
    # chips (v7x); on 1-TC parts the split only adds mask + duplicate-DMA cost.
    # TODO(synk): verify the "parallel" axis actually shards across both v7x
    # TensorCores in a trace; switch to CORE_PARALLEL / core_map if it doesn't.
    num_chunks = 2 if (_num_tensorcores_per_chip() >= 2 and steps_total >= 2) else 1
    steps_per_chunk = -(-steps_total // num_chunks)
    emit_mask = (num_chunks * steps_per_chunk * block_rows) > rows

    def in_index_map(c, i):
        # Clamp so a duplicated trailing step still points at a valid block;
        # its contribution is masked to zero inside the kernel.
        return (jnp.minimum(i * num_chunks + c, steps_total - 1), 0)

    kernel = functools.partial(
        _bce_kernel,
        block_rows=block_rows,
        sub_rows=sub_rows,
        num_chunks=num_chunks,
        steps_total=steps_total,
        valid_rows=rows,
        emit_mask=emit_mask,
    )

    partials = pl.pallas_call(
        kernel,
        out_shape=jax.ShapeDtypeStruct((num_chunks, _SUBLANES, _LANES), jnp.float32),
        grid_spec=pltpu.PrefetchScalarGridSpec(
            num_scalar_prefetch=0,
            grid=(num_chunks, steps_per_chunk),
            in_specs=[
                pl.BlockSpec((block_rows, _LANES), in_index_map),
                pl.BlockSpec((block_rows, _LANES), in_index_map),
            ],
            out_specs=pl.BlockSpec((1, _SUBLANES, _LANES), lambda c, i: (c, 0, 0)),
        ),
        compiler_params=pltpu.CompilerParams(
            dimension_semantics=("parallel", "arbitrary"),
            vmem_limit_bytes=_VMEM_LIMIT_BYTES,
        ),
    )(x2d, t2d)

    # Single tiny cross-lane reduce + mean, done once outside the kernel.
    return jnp.sum(partials) / n


if __name__ == "__main__":
    key = jax.random.PRNGKey(0)
    k1, k2 = jax.random.split(key)

    # Small NCHW-like shapes consistent with a segmentation-style BCE loss.
    shape = (2, 4, 16, 16)
    logits = jax.random.normal(k1, shape, dtype=jnp.float32)
    inputs = jax.nn.sigmoid(logits)                     # probabilities in (0, 1)
    targets = (jax.random.uniform(k2, shape) > 0.5).astype(jnp.float32)

    loss = jax.block_until_ready(bce_loss(inputs, targets))

    # Reference check in plain JAX.
    x = inputs.reshape(-1).astype(jnp.float32)
    t = targets.reshape(-1).astype(jnp.float32)
    ref = jnp.mean(-(t * jnp.maximum(jnp.log(x), -100.0)
                     + (1.0 - t) * jnp.maximum(jnp.log(1.0 - x), -100.0)))
    assert jnp.allclose(loss, ref, rtol=1e-5, atol=1e-6), (loss, ref)

    print("KERNEL_OK")
</pallas_src>

<mosaic_0001>
module attributes {stable_mosaic.version = 11 : i64} {
  func.func @_bce_kernel(%arg0: i32, %arg1: i32, %arg2: memref<16x128xf32, #tpu.memory_space<vmem>>, %arg3: memref<16x128xf32, #tpu.memory_space<vmem>>, %arg4: memref<1x8x128xf32, #tpu.memory_space<vmem>>) attributes {dimension_semantics = [#tpu.dimension_semantics<parallel>, #tpu.dimension_semantics<arbitrary>], iteration_bounds = array<i64: 1, 1>, scalar_prefetch = 0 : i64, scratch_operands = 0 : i64, tpu.core_type = #tpu.core_type<tc>, window_params = [{transform_indices = @transform_0, window_bounds = array<i64: 16, 128>}, {transform_indices = @transform_1, window_bounds = array<i64: 16, 128>}, {transform_indices = @transform_2, window_bounds = array<i64: 1, 8, 128>}]} {
    %c0_i32 = arith.constant 0 : i32
    %0 = arith.cmpi eq, %arg1, %c0_i32 : i32
    %1 = arith.extui %0 : i1 to i32
    %c0_i32_0 = arith.constant 0 : i32
    %2 = arith.cmpi ne, %1, %c0_i32_0 : i32
    scf.if %2 {
      %cst_15 = arith.constant 0.000000e+00 : f32
      %32 = vector.broadcast %cst_15 : f32 to vector<1x8x128xf32>
      %c0_16 = arith.constant 0 : index
      %c0_17 = arith.constant 0 : index
      %c0_18 = arith.constant 0 : index
      %33 = vector.load %arg4[%c0_16, %c0_17, %c0_18] : memref<1x8x128xf32, #tpu.memory_space<vmem>>, vector<1x8x128xf32>
      tpu.vector_store %arg4[%c0_16, %c0_17, %c0_18], %32 {strides = array<i32>} : memref<1x8x128xf32, #tpu.memory_space<vmem>>, vector<1x8x128xf32>,
    } else {
    }
    %cst = arith.constant 0.000000e+00 : f32
    %3 = vector.broadcast %cst : f32 to vector<8x128xf32>
    %c0_i32_1 = arith.constant 0 : i32
    %c16_i32 = arith.constant 16 : i32
    %4 = arith.muli %c0_i32_1, %c16_i32 : i32
    %5 = tpu.assume_multiple %4, 16 : i32
    %6 = arith.index_cast %5 : i32 to index
    %c0 = arith.constant 0 : index
    %7 = vector.load %arg2[%6, %c0] : memref<16x128xf32, #tpu.memory_space<vmem>>, vector<16x128xf32>
    %8 = arith.index_cast %5 : i32 to index
    %c0_2 = arith.constant 0 : index
    %9 = vector.load %arg3[%8, %c0_2] : memref<16x128xf32, #tpu.memory_space<vmem>>, vector<16x128xf32>
    %10 = math.log %7 : vector<16x128xf32>
    %cst_3 = arith.constant -1.000000e+02 : f32
    %11 = vector.broadcast %cst_3 : f32 to vector<16x128xf32>
    %12 = arith.maximumf %10, %11 : vector<16x128xf32>
    %cst_4 = arith.constant 1.000000e+00 : f32
    %13 = vector.broadcast %cst_4 : f32 to vector<16x128xf32>
    %14 = arith.subf %13, %7 : vector<16x128xf32>
    %15 = math.log %14 : vector<16x128xf32>
    %cst_5 = arith.constant -1.000000e+02 : f32
    %16 = vector.broadcast %cst_5 : f32 to vector<16x128xf32>
    %17 = arith.maximumf %15, %16 : vector<16x128xf32>
    %18 = arith.mulf %9, %12 : vector<16x128xf32>
    %cst_6 = arith.constant 1.000000e+00 : f32
    %19 = vector.broadcast %cst_6 : f32 to vector<16x128xf32>
    %20 = arith.subf %19, %9 : vector<16x128xf32>
    %21 = arith.mulf %20, %17 : vector<16x128xf32>
    %22 = arith.addf %18, %21 : vector<16x128xf32>
    %cst_7 = arith.constant 0.000000e+00 : f32
    %23 = vector.broadcast %cst_7 : f32 to vector<16x128xf32>
    %24 = arith.subf %23, %22 : vector<16x128xf32>
    %25 = vector.shape_cast %24 : vector<16x128xf32> to vector<2x8x128xf32>
    %cst_8 = arith.constant dense<0.000000e+00> : vector<8x128xf32>
    %26 = vector.multi_reduction <add>, %25, %cst_8 [0] : vector<2x8x128xf32> to vector<8x128xf32>
    %27 = arith.addf %3, %26 : vector<8x128xf32>
    %c1_i32 = arith.constant 1 : i32
    %c0_9 = arith.constant 0 : index
    %c0_10 = arith.constant 0 : index
    %c0_11 = arith.constant 0 : index
    %28 = vector.load %arg4[%c0_9, %c0_10, %c0_11] : memref<1x8x128xf32, #tpu.memory_space<vmem>>, vector<1x8x128xf32>
    %29 = vector.shape_cast %27 : vector<8x128xf32> to vector<1x8x128xf32>
    %30 = arith.addf %28, %29 : vector<1x8x128xf32>
    %c0_12 = arith.constant 0 : index
    %c0_13 = arith.constant 0 : index
    %c0_14 = arith.constant 0 : index
    %31 = vector.load %arg4[%c0_12, %c0_13, %c0_14] : memref<1x8x128xf32, #tpu.memory_space<vmem>>, vector<1x8x128xf32>
    tpu.vector_store %arg4[%c0_12, %c0_13, %c0_14], %30 {strides = array<i32>} : memref<1x8x128xf32, #tpu.memory_space<vmem>>, vector<1x8x128xf32>,
    return
  }
  func.func @transform_0(%arg0: i32, %arg1: i32) -> (i32, i32) {
    %c1_i32 = arith.constant 1 : i32
    %0 = arith.muli %arg1, %c1_i32 : i32
    %1 = arith.addi %0, %arg0 : i32
    %c0_i32 = arith.constant 0 : i32
    %2 = arith.minsi %1, %c0_i32 : i32
    %c0_i32_0 = arith.constant 0 : i32
    %c0_i32_1 = arith.constant 0 : i32
    return %2, %c0_i32_0 : i32, i32
  }
  func.func @transform_1(%arg0: i32, %arg1: i32) -> (i32, i32) {
    %c1_i32 = arith.constant 1 : i32
    %0 = arith.muli %arg1, %c1_i32 : i32
    %1 = arith.addi %0, %arg0 : i32
    %c0_i32 = arith.constant 0 : i32
    %2 = arith.minsi %1, %c0_i32 : i32
    %c0_i32_0 = arith.constant 0 : i32
    %c0_i32_1 = arith.constant 0 : i32
    return %2, %c0_i32_0 : i32, i32
  }
  func.func @transform_2(%arg0: i32, %arg1: i32) -> (i32, i32, i32) {
    %c0_i32 = arith.constant 0 : i32
    %c0_i32_0 = arith.constant 0 : i32
    %c0_i32_1 = arith.constant 0 : i32
    return %arg0, %c0_i32, %c0_i32_0 : i32, i32, i32
  }
}

</mosaic_0001>

<llo_original>
// kernel: tpu_custom_call.1
$region0: #{tpu_custom_call.1}
  #allocation0 [shape = 'u32[]', space=smem, size = 0x4, offset = 0x4, fixed_abs, tag = 'smem constant byte address 0x4 - core index']
  #allocation1 [shape = 'u32[72,128]{1,0:T(1,128)}', space=vmem, size = 0x9000, scoped, tag = 'internal scratch']
  %s0 = inlined_call_operand.hbm [shape: f32[16,128], index: 0, kind: input, shape index: {}]
  %s1 = inlined_call_operand.hbm [shape: f32[16,128], index: 1, kind: input, shape index: {}]
  %s2 = inlined_call_operand.hbm [shape: f32[1,8,128], index: 2, kind: output, shape index: {}]
  %s3 = sld [smem:[#allocation0]]
  $region30: #{tpu_custom_call.1} parent=0
    _
  %s5 = ssub.s32 1, %s3
  %s6 = scalar_select 0, %s5, %s3
  $region1: #{tpu_custom_call.1} parent=0
    #allocation2 [shape = 'u8[8192]{0}', space=vmem, size = 0x2000, scoped, tag = 'input window, operand 0, single buffered']
    #allocation3 [shape = 's32[1]{0}', space=sflag, size = 0x4, scoped, tag = 'scoped memory for tpu_custom_call.1']
    #allocation4 [shape = 's32[1]{0}', space=sflag, size = 0x4, scoped, tag = 'scoped memory for tpu_custom_call.1']
    #allocation5 [shape = 'u8[8192]{0}', space=vmem, size = 0x2000, scoped, tag = 'input window, operand 1, single buffered']
    #allocation6 [shape = 's32[1]{0}', space=sflag, size = 0x4, scoped, tag = 'scoped memory for tpu_custom_call.1']
    #allocation7 [shape = 'u8[4096]{0}', space=vmem, size = 0x1000, scoped, tag = 'output window, operand 0, single buffered']
    %7 = vsyncpa [#allocation3], 0
    %8 = vsyncpa [#allocation6], 0
    %9 = vsyncpa [#allocation4], 0
    // Predicated region
    $region2: #{tpu_custom_call.1} parent=1 // pred_check
      _
    $region3: #{tpu_custom_call.1} parent=1 // pred_check_branch
      %11 = sbr.rel (0) target = $region5
    $region4: #{tpu_custom_call.1} parent=1 // pred_region
      %s12 = sadd.s32 0, 0
      %p13 = scmp.lt.s32.totalorder %s12, 0
      %s14 = scalar_select %p13, %s12, 0
      %s15 = smul.u32 2, %s14
      %17 = vsyncadd [#allocation3], 0
      %s18 = smul.addr %s15, 8
      %s19 = scalar_lea.hbm %s0, %s18
      %s20 = sshll.u32 %s19, 4
      %s21 = int_to_ptr.hbm [resolvable:$true] %s20
      %s22 = sshll.u32 [#allocation2], 4
      %s23 = int_to_ptr.vmem [resolvable:$true] %s22
      %28 = dma.hbm_to_vmem [thread:$0]  %s21, 256, %s23, [#allocation3], 128, 128, 8
    $region5: #{tpu_custom_call.1} parent=1 // pred_fallthru
      _
    // Predicated region
    $region6: #{tpu_custom_call.1} parent=1 // pred_check
      _
    $region7: #{tpu_custom_call.1} parent=1 // pred_check_branch
      %30 = sbr.rel (0) target = $region9
    $region8: #{tpu_custom_call.1} parent=1 // pred_region
      %s31 = sadd.s32 0, 0
      %p32 = scmp.lt.s32.totalorder %s31, 0
      %s33 = scalar_select %p32, %s31, 0
      %s34 = smul.u32 2, %s33
      %36 = vsyncadd [#allocation6], 0
      %s37 = smul.addr %s34, 8
      %s38 = scalar_lea.hbm %s1, %s37
      %s39 = sshll.u32 %s38, 4
      %s40 = int_to_ptr.hbm [resolvable:$true] %s39
      %s41 = sshll.u32 [#allocation5], 4
      %s42 = int_to_ptr.vmem [resolvable:$true] %s41
      %47 = dma.hbm_to_vmem [thread:$0]  %s40, 256, %s42, [#allocation6], 128, 128, 8
    $region9: #{tpu_custom_call.1} parent=1 // pred_fallthru
      _
    // Predicated region
    $region10: #{tpu_custom_call.1} parent=1 // pred_check
      _
    $region11: #{tpu_custom_call.1} parent=1 // pred_check_branch
      %49 = sbr.rel (0) target = $region13
    $region12: #{tpu_custom_call.1} parent=1 // pred_region
      %51 = dma.done [#allocation3], 256
    $region13: #{tpu_custom_call.1} parent=1 // pred_fallthru
      _
    // Predicated region
    $region14: #{tpu_custom_call.1} parent=1 // pred_check
      _
    $region15: #{tpu_custom_call.1} parent=1 // pred_check_branch
      %53 = sbr.rel (0) target = $region17
    $region16: #{tpu_custom_call.1} parent=1 // pred_region
      %55 = dma.done [#allocation6], 256
    $region17: #{tpu_custom_call.1} parent=1 // pred_fallthru
      _
    %s56 = sadd.s32 0, 0
    %p57 = scmp.lt.s32.totalorder %s56, 0
    %s58 = scalar_select %p57, %s56, 0
    %s59 = smul.u32 2, %s58
    %s60 = sadd.s32 0, 0
    %p61 = scmp.lt.s32.totalorder %s60, 0
    %s62 = scalar_select %p61, %s60, 0
    %s63 = smul.u32 2, %s62
    %p64 = scmp.eq.s32.totalorder 0, 0
    // Predicated region
    $region18: #{tpu_custom_call.1} parent=1 // pred_check
      %p65 = pneg %p64
    $region19: #{tpu_custom_call.1} parent=1 // pred_check_branch
      %67 = sbr.rel (%p65) target = $region21
    $region20: #{tpu_custom_call.1} parent=1 // pred_region
      %68 = vst [vmem:[#allocation7] sm:$0xff] 0.0
    $region21: #{tpu_custom_call.1} parent=1 // pred_fallthru
      _
    %v69 = vld [vmem:[#allocation2] sm:$0xff]
    %v70 = vld [vmem:[#allocation2 + $0x8] sm:$0xff]
    %v71 = vld [vmem:[#allocation5] sm:$0xff]
    %v72 = vld [vmem:[#allocation5 + $0x8] sm:$0xff]
    %v73 = vlog2.pop %v69
    %v74 = vmul.f32 %v73, 0.6931472
    %v75 = vlog2.pop %v70
    %v76 = vmul.f32 %v75, 0.6931472
    %v77 = vmax.f32 %v74, -100.0
    %v78 = vmax.f32 %v76, -100.0
    %v79 = vsub.f32 1.0, %v69
    %v80 = vsub.f32 1.0, %v70
    %v81 = vlog2.pop %v79
    %v82 = vmul.f32 %v81, 0.6931472
    %v83 = vlog2.pop %v80
    %v84 = vmul.f32 %v83, 0.6931472
    %v85 = vmax.f32 %v82, -100.0
    %v86 = vmax.f32 %v84, -100.0
    %v87 = vmul.f32 %v71, %v77
    %v88 = vmul.f32 %v72, %v78
    %v89 = vsub.f32 1.0, %v71
    %v90 = vsub.f32 1.0, %v72
    %v91 = vmul.f32 %v89, %v85
    %v92 = vmul.f32 %v90, %v86
    %v93 = vadd.f32 %v87, %v91
    %v94 = vadd.f32 %v88, %v92
    %v95 = vsub.f32 0.0, %v93
    %v96 = vsub.f32 0.0, %v94
    %v97 = vadd.f32 %v95, %v96
    %v98 = vadd.f32 %v97, 0.0
    %v99 = vld [vmem:[#allocation7] sm:$0xff]
    %v100 = vadd.f32 %v99, %v98
    %101 = vst [vmem:[#allocation7] sm:$0xff] %v100
    // Predicated region
    $region22: #{tpu_custom_call.1} parent=1 // pred_check
      _
    $region23: #{tpu_custom_call.1} parent=1 // pred_check_branch
      %103 = sbr.rel (0) target = $region25
    $region24: #{tpu_custom_call.1} parent=1 // pred_region
      %105 = vsyncadd [#allocation4], 0
      %s107 = sshll.u32 [#allocation7], 4
      %s108 = int_to_ptr.vmem [resolvable:$true] %s107
      %s109 = sshll.u32 %s2, 4
      %s110 = int_to_ptr.hbm [resolvable:$true] %s109
      %112 = dma.vmem_to_hbm [thread:$0]  %s108, 128, %s110, [#allocation4]
    $region25: #{tpu_custom_call.1} parent=1 // pred_fallthru
      _
    // Predicated region
    $region26: #{tpu_custom_call.1} parent=1 // pred_check
      _
    $region27: #{tpu_custom_call.1} parent=1 // pred_check_branch
      %114 = sbr.rel (0) target = $region29
    $region28: #{tpu_custom_call.1} parent=1 // pred_region
      %116 = dma.done [#allocation4], 128
    $region29: #{tpu_custom_call.1} parent=1 // pred_fallthru
      _
    %117 = vsyncpa [#allocation3], 1
    %118 = vsyncpa [#allocation6], 1
    %119 = vsyncpa [#allocation4], 1

</llo_original>
